<compile_context>
chip_gen: v6e
topology: v6e:2x2x1
jax: 0.10.0
libtpu: 0.0.40
codegen_flags: <defaults>
</compile_context>

<pallas_src>
from functools import partial

import jax
import jax.numpy as jnp
import numpy as np
from jax.experimental import pallas as pl
from jax.experimental.pallas import tpu as pltpu


# --------------------- kernel 1: hoisted first layer ----------------------- #
def _first_layer_kernel(x_ref, w1l_ref, w1r_ref, b1_ref, a_ref, c_ref):
    """A = x @ W1L + b1 ;  C = x @ W1R   (per (batch, row-tile) grid step)."""
    x = x_ref[0]                                                   # (T, D) bf16
    a = jnp.dot(x, w1l_ref[...], preferred_element_type=jnp.float32) + b1_ref[...]
    a_ref[0] = a.astype(a_ref.dtype)
    c = jnp.dot(x, w1r_ref[...], preferred_element_type=jnp.float32)
    c_ref[0] = c.astype(c_ref.dtype)


# ----------------- kernel 2: pairwise tanh + head reductions --------------- #
def _pairwise_kernel(a_ref, c_ref, w2_ref, b2_ref,
                     shst_ref, shoh_ref, stot_ref, lab_ref, *, CH):
    """
    a_ref : (1, TI, 4L)  first-layer rows (b1 folded in)
    c_ref : (1, TJ, 4L)  first-layer cols
    w2_ref: (3+R, L)     one weight row per output channel
    b2_ref: (3+R,)       per-channel bias (SMEM scalars)
    outs  : 3 x (1, TI, TJ) scores  +  (1, TI, R, TJ) label logits
    """
    L = w2_ref.shape[1]
    R = lab_ref.shape[2]
    TI = a_ref.shape[1]
    n_chunks = TI // CH

    c = c_ref[0]                                                   # (TJ, 4L)
    scalar_refs = (shst_ref, shoh_ref, stot_ref)

    def do_chunk(r0):
        a = a_ref[0, pl.ds(r0, CH), :]                             # (CH, 4L)
        # One lane-dense broadcast-add + tanh for all four heads.
        h = jnp.tanh(a[:, None, :] + c[None, :, :])                # (CH, TJ, 4L)

        # span / h2h / t2t: weighted lane reductions over each head's L lanes;
        # result is (CH, TJ) with TJ already on lanes -> dense stores.
        for k, ref in enumerate(scalar_refs):
            hk = h[:, :, k * L:(k + 1) * L]                        # (CH, TJ, L)
            wk = w2_ref[k][None, None, :]                          # (1, 1, L)
            ref[0, pl.ds(r0, CH), :] = jnp.sum(hk * wk, axis=-1) + b2_ref[k]

        # label head: R weighted lane reductions over the 4th L-lane slice.
        hl = h[:, :, 3 * L:]                                       # (CH, TJ, L)
        for r in range(R):
            wr = w2_ref[3 + r][None, None, :]
            lab_ref[0, pl.ds(r0, CH), r, :] = (
                jnp.sum(hl * wr, axis=-1) + b2_ref[3 + r])

    def body(s, carry):
        do_chunk(pl.multiple_of(s * CH, CH))
        return carry

    jax.lax.fori_loop(0, n_chunks, body, 0)


# ------------------------------ JAX wrapper -------------------------------- #
def prepare_params(params):
    """Build the fused weights ONCE (outside the forward) from the raw
    per-head nn.Linear parameters."""
    heads = ("span", "h2h", "t2t", "label")
    for h in heads[:3]:
        assert params[h]["w2"].shape[0] == 1, "scalar heads must have n_out == 1"
    D = params["span"]["w1"].shape[1] // 2
    L = params["span"]["w1"].shape[0]

    # Fused first layer, split into the two halves of the virtual concat:
    #   W1 @ concat(x_i, x_j) == W1[:, :D] @ x_i + W1[:, D:] @ x_j
    w1l = jnp.concatenate([params[h]["w1"][:, :D].T for h in heads], axis=1)  # (D, 4L)
    w1r = jnp.concatenate([params[h]["w1"][:, D:].T for h in heads], axis=1)  # (D, 4L)
    b1 = jnp.concatenate([params[h]["b1"] for h in heads]).reshape(1, 4 * L)  # (1, 4L)

    # Fused second layer: one weight row / bias per output channel.
    w2 = jnp.concatenate(
        [params[h]["w2"] for h in heads[:3]] + [params["label"]["w2"]], axis=0)  # (3+R, L)
    b2 = jnp.concatenate(
        [params[h]["b2"] for h in heads[:3]] + [params["label"]["b2"]])          # (3+R,)

    return {
        "w1l": w1l.astype(jnp.bfloat16),   # MXU inputs in bf16, f32 accumulate
        "w1r": w1r.astype(jnp.bfloat16),
        "b1": b1.astype(jnp.float32),
        "w2": w2.astype(jnp.float32),      # lane-reduction weights stay f32
        "b2": b2.astype(jnp.float32),
    }


def first_order_concat_forward(x, fused, *, elementwise_dtype=jnp.float32):
    """Pallas implementation of FirstOrderConcat.forward (cse_label=False).

    elementwise_dtype: jnp.float32 (default, safe on v5e / tightest accuracy)
    or jnp.bfloat16 on v6e/v7x for ~2x add+tanh throughput.
    """
    B, S, D = x.shape
    L = fused["w2"].shape[1]
    R = fused["w2"].shape[0] - 3
    L4 = fused["b1"].shape[1]
    assert L4 == 4 * L

    # ---- tiling: cap tiles at 128, pad S to a multiple of 128 (crop later) ----
    if S <= 128:
        Sp, ti, tj = S, S, S
    else:
        Sp = ((S + 127) // 128) * 128
        ti = tj = 128
    CH = 32 if (ti > 32 and ti % 32 == 0) else ti          # in-kernel row chunk
    x_p = x if Sp == S else jnp.pad(x, ((0, 0), (0, Sp - S), (0, 0)))
    x_bf = x_p.astype(jnp.bfloat16)
    ew_bytes = np.dtype(elementwise_dtype).itemsize

    # ---- pre-pass: first layer hoisted out of the pairwise grid ----
    n_rows = Sp // ti
    pre_cost = pl.CostEstimate(
        flops=int(4 * B * Sp * D * L4),
        transcendentals=0,
        bytes_accessed=int(2 * B * Sp * D + 4 * D * L4
                           + 2 * B * Sp * L4 * ew_bytes),
    )
    a_act, c_act = pl.pallas_call(
        _first_layer_kernel,
        grid=(B, n_rows),
        in_specs=[
            pl.BlockSpec((1, ti, D), lambda b, i: (b, i, 0)),
            pl.BlockSpec((D, L4), lambda b, i: (0, 0)),
            pl.BlockSpec((D, L4), lambda b, i: (0, 0)),
            pl.BlockSpec((1, L4), lambda b, i: (0, 0)),
        ],
        out_specs=[
            pl.BlockSpec((1, ti, L4), lambda b, i: (b, i, 0)),
            pl.BlockSpec((1, ti, L4), lambda b, i: (b, i, 0)),
        ],
        out_shape=[jax.ShapeDtypeStruct((B, Sp, L4), elementwise_dtype)] * 2,
        compiler_params=pltpu.CompilerParams(
            dimension_semantics=("parallel", "parallel"),
            vmem_limit_bytes=32 * 1024 * 1024),
        cost_estimate=pre_cost,
    )(x_bf, fused["w1l"], fused["w1r"], fused["b1"])

    # ---- main pairwise kernel ----
    n_i, n_j = Sp // ti, Sp // tj
    main_cost = pl.CostEstimate(
        flops=int(B * Sp * Sp * (L4 + 2 * (3 + R) * L)),
        transcendentals=int(B * Sp * Sp * L4),
        bytes_accessed=int(B * Sp * L4 * (n_i + n_j) * ew_bytes
                           + 4 * B * Sp * Sp * (3 + R)),
    )
    shst_raw, shoh, stot, lab4 = pl.pallas_call(
        partial(_pairwise_kernel, CH=CH),
        grid=(B, n_i, n_j),
        in_specs=[
            pl.BlockSpec((1, ti, L4), lambda b, i, j: (b, i, 0)),   # rows (A)
            pl.BlockSpec((1, tj, L4), lambda b, i, j: (b, j, 0)),   # cols (C)
            pl.BlockSpec((3 + R, L), lambda b, i, j: (0, 0)),       # w2 rows
            pl.BlockSpec(memory_space=pltpu.MemorySpace.SMEM),      # b2 scalars
        ],
        out_specs=[
            pl.BlockSpec((1, ti, tj), lambda b, i, j: (b, i, j)),
            pl.BlockSpec((1, ti, tj), lambda b, i, j: (b, i, j)),
            pl.BlockSpec((1, ti, tj), lambda b, i, j: (b, i, j)),
            pl.BlockSpec((1, ti, R, tj), lambda b, i, j: (b, i, 0, j)),
        ],
        out_shape=[
            jax.ShapeDtypeStruct((B, Sp, Sp), jnp.float32),
            jax.ShapeDtypeStruct((B, Sp, Sp), jnp.float32),
            jax.ShapeDtypeStruct((B, Sp, Sp), jnp.float32),
            jax.ShapeDtypeStruct((B, Sp, R, Sp), jnp.float32),
        ],
        compiler_params=pltpu.CompilerParams(
            dimension_semantics=("parallel", "parallel", "parallel"),
            vmem_limit_bytes=32 * 1024 * 1024),
        cost_estimate=main_cost,
    )(a_act, c_act, fused["w2"], fused["b2"])

    # ---- cheap XLA glue: crop padding, symmetrize shst, restore label layout ----
    shst_raw = shst_raw[:, :S, :S]
    shoh = shoh[:, :S, :S]
    stot = stot[:, :S, :S]
    labels = jnp.transpose(lab4, (0, 1, 3, 2))[:, :S, :S, :]       # (B, S, S, R)
    #   shst[b,i,j] = raw[b, max(i,j), min(i,j)]   (matches the torch triu glue)
    shst = jnp.tril(shst_raw) + jnp.swapaxes(jnp.tril(shst_raw, -1), -1, -2)
    return shst, shoh, stot, labels


# --------------------------- pure-JAX reference ---------------------------- #
def ref_forward(x, params):
    B, S, D = x.shape
    xl = jnp.broadcast_to(x[:, :, None, :], (B, S, S, D))
    xr = jnp.broadcast_to(x[:, None, :, :], (B, S, S, D))
    x_ = jnp.concatenate([xl, xr], axis=-1)  # (B, S, S, 2D)

    def mlp(p):
        h = jnp.tanh(
            jnp.einsum("bijd,ld->bijl", x_, p["w1"], precision="highest") + p["b1"]
        )
        return jnp.einsum("bijl,nl->bijn", h, p["w2"], precision="highest") + p["b2"]

    s_raw = mlp(params["span"])[..., 0]
    shst = jnp.tril(s_raw) + jnp.swapaxes(jnp.tril(s_raw, -1), -1, -2)
    shoh = mlp(params["h2h"])[..., 0]
    stot = mlp(params["t2t"])[..., 0]
    labels = mlp(params["label"])
    return shst, shoh, stot, labels


# ---------------------------- parameter setup ------------------------------ #
def init_params(key, input_dim, linear_dim, n_rel_labels,
                span_n_out=1, arc_n_out=1):
    """Deterministic synthetic params mirroring the nn.Linear shapes."""
    hidden_dim = 2 * input_dim

    def linear(k, out_dim, in_dim):
        k1, k2 = jax.random.split(k)
        bound = 1.0 / np.sqrt(in_dim)
        w = jax.random.uniform(k1, (out_dim, in_dim), jnp.float32, -bound, bound)
        b = jax.random.uniform(k2, (out_dim,), jnp.float32, -bound, bound)
        return w, b

    def two_layer(k, n_out):
        k1, k2 = jax.random.split(k)
        w1, b1 = linear(k1, linear_dim, hidden_dim)
        w2, b2 = linear(k2, n_out, linear_dim)
        return {"w1": w1, "b1": b1, "w2": w2, "b2": b2}

    ks = jax.random.split(key, 4)
    return {
        "span": two_layer(ks[0], span_n_out),
        "h2h": two_layer(ks[1], arc_n_out),
        "t2t": two_layer(ks[2], arc_n_out),
        "label": two_layer(ks[3], n_rel_labels),  # cse_label=False path
    }


# ---------------------------------- main ----------------------------------- #
if __name__ == "__main__":
    B, S, D = 2, 8, 16          # batch, seq_len, input_dim
    LINEAR_DIM = 32             # conf.linear_dim  -> 4L = 128 (full lane width)
    N_REL_LABELS = 5            # n_rel_labels

    key = jax.random.PRNGKey(0)
    kx, kp = jax.random.split(key)
    x = jax.random.normal(kx, (B, S, D), jnp.float32)
    params = init_params(kp, D, LINEAR_DIM, N_REL_LABELS)

    fused = prepare_params(params)              # built once, reused per forward
    outs = first_order_concat_forward(x, fused)  # f32 elementwise (v5e-safe)
    outs = jax.block_until_ready(outs)

    refs = ref_forward(x, params)
    names = ("shst", "shoh", "stot", "shoh_labels")
    for name, got, want in zip(names, outs, refs):
        assert got.shape == want.shape, (name, got.shape, want.shape)
        # bf16 MXU inputs in the hoisted first layer (f32 accumulation);
        # everything after that is f32 -> comfortably within 1e-2.
        np.testing.assert_allclose(np.asarray(got), np.asarray(want),
                                   atol=1e-2, rtol=1e-2)

    print("KERNEL_OK")
</pallas_src>

<mosaic_0001>
module attributes {stable_mosaic.version = 11 : i64} {
  func.func @_first_layer_kernel(%arg0: i32, %arg1: i32, %arg2: memref<1x8x16xbf16, #tpu.memory_space<vmem>>, %arg3: memref<16x128xbf16, #tpu.memory_space<vmem>>, %arg4: memref<16x128xbf16, #tpu.memory_space<vmem>>, %arg5: memref<1x128xf32, #tpu.memory_space<vmem>>, %arg6: memref<1x8x128xf32, #tpu.memory_space<vmem>>, %arg7: memref<1x8x128xf32, #tpu.memory_space<vmem>>) attributes {dimension_semantics = [#tpu.dimension_semantics<parallel>, #tpu.dimension_semantics<parallel>], iteration_bounds = array<i64: 2, 1>, scalar_prefetch = 0 : i64, scratch_operands = 0 : i64, tpu.core_type = #tpu.core_type<tc>, window_params = [{transform_indices = @transform_0, window_bounds = array<i64: 1, 8, 16>}, {pipeline_mode = #tpu.pipeline_mode<synchronous>, transform_indices = @transform_1, window_bounds = array<i64: 16, 128>}, {pipeline_mode = #tpu.pipeline_mode<synchronous>, transform_indices = @transform_2, window_bounds = array<i64: 16, 128>}, {pipeline_mode = #tpu.pipeline_mode<synchronous>, transform_indices = @transform_3, window_bounds = array<i64: 1, 128>}, {transform_indices = @transform_4, window_bounds = array<i64: 1, 8, 128>}, {transform_indices = @transform_5, window_bounds = array<i64: 1, 8, 128>}]} {
    %c0 = arith.constant 0 : index
    %c0_0 = arith.constant 0 : index
    %c0_1 = arith.constant 0 : index
    %0 = vector.load %arg2[%c0, %c0_0, %c0_1] : memref<1x8x16xbf16, #tpu.memory_space<vmem>>, vector<1x8x16xbf16>
    %1 = vector.shape_cast %0 : vector<1x8x16xbf16> to vector<8x16xbf16>
    %c0_2 = arith.constant 0 : index
    %c0_3 = arith.constant 0 : index
    %2 = vector.load %arg3[%c0_2, %c0_3] : memref<16x128xbf16, #tpu.memory_space<vmem>>, vector<16x128xbf16>
    %cst = arith.constant dense<0.000000e+00> : vector<8x128xf32>
    %3 = tpu.matmul %1, %2, %cst {dimension_numbers = #tpu.dot_dimension_numbers<[1], [0], [0], [1], [0, 0, 1, 1], [], []>} : vector<8x16xbf16>, vector<16x128xbf16>, vector<8x128xf32> -> vector<8x128xf32>
    %c0_4 = arith.constant 0 : index
    %c0_5 = arith.constant 0 : index
    %4 = vector.load %arg5[%c0_4, %c0_5] : memref<1x128xf32, #tpu.memory_space<vmem>>, vector<1x128xf32>
    %5 = vector.broadcast %4 : vector<1x128xf32> to vector<8x128xf32>
    %6 = arith.addf %3, %5 : vector<8x128xf32>
    %c0_6 = arith.constant 0 : index
    %c0_7 = arith.constant 0 : index
    %c0_8 = arith.constant 0 : index
    %7 = vector.load %arg6[%c0_6, %c0_7, %c0_8] : memref<1x8x128xf32, #tpu.memory_space<vmem>>, vector<1x8x128xf32>
    %8 = vector.shape_cast %7 : vector<1x8x128xf32> to vector<8x128xf32>
    %9 = vector.shape_cast %6 : vector<8x128xf32> to vector<1x8x128xf32>
    tpu.vector_store %arg6[%c0_6, %c0_7, %c0_8], %9 {strides = array<i32>} : memref<1x8x128xf32, #tpu.memory_space<vmem>>, vector<1x8x128xf32>,
    %c0_9 = arith.constant 0 : index
    %c0_10 = arith.constant 0 : index
    %10 = vector.load %arg4[%c0_9, %c0_10] : memref<16x128xbf16, #tpu.memory_space<vmem>>, vector<16x128xbf16>
    %cst_11 = arith.constant dense<0.000000e+00> : vector<8x128xf32>
    %11 = tpu.matmul %1, %10, %cst_11 {dimension_numbers = #tpu.dot_dimension_numbers<[1], [0], [0], [1], [0, 0, 1, 1], [], []>} : vector<8x16xbf16>, vector<16x128xbf16>, vector<8x128xf32> -> vector<8x128xf32>
    %c0_12 = arith.constant 0 : index
    %c0_13 = arith.constant 0 : index
    %c0_14 = arith.constant 0 : index
    %12 = vector.load %arg7[%c0_12, %c0_13, %c0_14] : memref<1x8x128xf32, #tpu.memory_space<vmem>>, vector<1x8x128xf32>
    %13 = vector.shape_cast %12 : vector<1x8x128xf32> to vector<8x128xf32>
    %14 = vector.shape_cast %11 : vector<8x128xf32> to vector<1x8x128xf32>
    tpu.vector_store %arg7[%c0_12, %c0_13, %c0_14], %14 {strides = array<i32>} : memref<1x8x128xf32, #tpu.memory_space<vmem>>, vector<1x8x128xf32>,
    return
  }
  func.func @transform_0(%arg0: i32, %arg1: i32) -> (i32, i32, i32) {
    %c0_i32 = arith.constant 0 : i32
    %c0_i32_0 = arith.constant 0 : i32
    return %arg0, %arg1, %c0_i32 : i32, i32, i32
  }
  func.func @transform_1(%arg0: i32, %arg1: i32) -> (i32, i32) {
    %c0_i32 = arith.constant 0 : i32
    %c0_i32_0 = arith.constant 0 : i32
    %c0_i32_1 = arith.constant 0 : i32
    return %c0_i32, %c0_i32_0 : i32, i32
  }
  func.func @transform_2(%arg0: i32, %arg1: i32) -> (i32, i32) {
    %c0_i32 = arith.constant 0 : i32
    %c0_i32_0 = arith.constant 0 : i32
    %c0_i32_1 = arith.constant 0 : i32
    return %c0_i32, %c0_i32_0 : i32, i32
  }
  func.func @transform_3(%arg0: i32, %arg1: i32) -> (i32, i32) {
    %c0_i32 = arith.constant 0 : i32
    %c0_i32_0 = arith.constant 0 : i32
    %c0_i32_1 = arith.constant 0 : i32
    return %c0_i32, %c0_i32_0 : i32, i32
  }
  func.func @transform_4(%arg0: i32, %arg1: i32) -> (i32, i32, i32) {
    %c0_i32 = arith.constant 0 : i32
    %c0_i32_0 = arith.constant 0 : i32
    return %arg0, %arg1, %c0_i32 : i32, i32, i32
  }
  func.func @transform_5(%arg0: i32, %arg1: i32) -> (i32, i32, i32) {
    %c0_i32 = arith.constant 0 : i32
    %c0_i32_0 = arith.constant 0 : i32
    return %arg0, %arg1, %c0_i32 : i32, i32, i32
  }
}

</mosaic_0001>

<llo_original>
// kernel: tpu_custom_call.1
$region0: #{tpu_custom_call.1}
  #allocation0 [shape = 'u32[]', space=smem, size = 0x4, offset = 0x4, fixed_abs, tag = 'smem constant byte address 0x4 - core index']
  #allocation1 [shape = 'u32[144,128]{1,0:T(1,128)}', space=vmem, size = 0x12000, scoped, tag = 'internal scratch']
  %s0 = inlined_call_operand.hbm [shape: bf16[2,8,16], index: 0, kind: input, shape index: {}]
  %s1 = inlined_call_operand.hbm [shape: bf16[16,128], index: 1, kind: input, shape index: {}]
  %s2 = inlined_call_operand.hbm [shape: bf16[16,128], index: 2, kind: input, shape index: {}]
  %s3 = inlined_call_operand.vmem [shape: f32[1,128], index: 3, kind: input, shape index: {}]
  %s4 = inlined_call_operand.hbm [shape: f32[2,8,128], index: 4, kind: output, shape index: {0}]
  %s5 = inlined_call_operand.hbm [shape: f32[2,8,128], index: 5, kind: output, shape index: {1}]
  %6 = xla_tuple %s4, %s5
  %s7 = sld [smem:[#allocation0]]
  $region69: #{tpu_custom_call.1} parent=0
    _
  %s9 = ssub.s32 1, %s7
  %s10 = scalar_select 0, %s9, %s7
  $region1: #{tpu_custom_call.1} parent=0
    #allocation2 [shape = 'u8[4096]{0}', space=vmem, size = 0x1000, scoped, tag = 'input window, operand 0']
    #allocation3 [shape = 's32[2]{0}', space=sflag, size = 0x8, scoped, tag = 'scoped memory for tpu_custom_call.1']
    #allocation4 [shape = 's32[2]{0}', space=sflag, size = 0x8, scoped, tag = 'scoped memory for tpu_custom_call.1']
    #allocation5 [shape = 'u8[4096]{0}', space=vmem, size = 0x1000, scoped, tag = 'input window, operand 1, single buffered']
    #allocation6 [shape = 's32[1]{0}', space=sflag, size = 0x4, scoped, tag = 'scoped memory for tpu_custom_call.1']
    #allocation7 [shape = 'u8[4096]{0}', space=vmem, size = 0x1000, scoped, tag = 'input window, operand 2, single buffered']
    #allocation8 [shape = 'u8[8192]{0}', space=vmem, size = 0x2000, scoped, tag = 'output window, operand 0']
    #allocation9 [shape = 'u8[8192]{0}', space=vmem, size = 0x2000, scoped, tag = 'output window, operand 1']
    #allocation10 [shape = 's32[2]{0}', space=sflag, size = 0x8, scoped, tag = 'scoped memory for tpu_custom_call.1']
    %11 = vsyncpa [#allocation3], 0
    %s12 = scalar_lea.sflag [#allocation3], 1
    %13 = vsyncpa %s12, 0
    %14 = vsyncpa [#allocation6], 0
    %15 = vsyncpa [#allocation4], 0
    %s16 = scalar_lea.sflag [#allocation4], 1
    %17 = vsyncpa %s16, 0
    %18 = vsyncpa [#allocation10], 0
    %s19 = scalar_lea.sflag [#allocation10], 1
    %20 = vsyncpa %s19, 0
    loop: start=0, step=1, limit=4
    $region2: #{tpu_custom_call.1} parent=1 // loop_pre_header
      _
    $region3: #{tpu_custom_call.1} parent=1 // loop_header
      %s22 = sphi 0, %s26
      %p23 = scmp.ge.s32.totalorder %s22, 4
      %s29 = sphi 0, %s41
      %s30 = sphi 0, %s37
      %s31 = sphi 0, %s29
      %s32 = sphi 0, %s30
      %s33 = sphi 0, %s31
      %s34 = sphi 0, %s32
      %s46 = sphi 0, %s48
      %s49 = sphi 0, %s46
      %s50 = sphi 0, %s49
      %s66 = sphi 0, %s50
      %s70 = sphi 0, %s70
      %s72 = sphi 0, %s70
      %s73 = sphi 0, %s72
      %s87 = sphi 0, %s73
      %s91 = sphi 0, %s91
      %s93 = sphi 0, %s91
      %s94 = sphi 0, %s93
      %s108 = sphi 0, %s94
      %s112 = sphi 0, %s112
      %s114 = sphi 0, %s112
      %s115 = sphi 0, %s114
      %s129 = sphi 0, %s115
      %s137 = sphi 0, %s139
      %s140 = sphi 0, %s137
      %s141 = sphi 0, %s140
      %s157 = sphi 0, %s141
      %s165 = sphi 0, %s167
      %s168 = sphi 0, %s165
      %s169 = sphi 0, %s168
      %s185 = sphi 0, %s169
    $region4: #{tpu_custom_call.1} parent=1 // loop_header_branch
      %25 = sbr.rel (%p23) target = $region8
    $region5: #{tpu_custom_call.1} parent=1 // loop_body
      %s27 = ssub.s32 %s22, 1
      %s28 = ssub.s32 %s22, 2
      %s35 = sadd.s32 1, %s30
      %p36 = scmp.ge.s32.totalorder %s35, 1
      %s37 = scalar_select %p36, 0, %s35
      %s38 = sadd.s32 1, %s29
      %s39 = scalar_select %p36, %s38, %s29
      %p40 = scmp.ge.s32.totalorder %s39, 2
      %s41 = scalar_select %p40, 0, %s39
      %s42 = ssub.s32 %s29, %s41
      %s43 = ssub.s32 %s30, %s37
      %s44 = sor.u32 %s42, %s43
      %p45 = scmp.eq.s32.totalorder %s44, 0
      %s47 = sadd.s32 %s46, 1
      %s48 = scalar_select %p45, %s46, %s47
      %p51 = pneg %p45
      %p52 = scmp.eq.s32.totalorder %s22, 1
      %p53 = por %p51, %p52
      %p54 = scmp.ne.s32.totalorder %s46, %s49
      %p55 = scmp.eq.s32.totalorder %s22, 0
      %p56 = por %p54, %p55
      %p57 = scmp.ne.s32.totalorder %s46, %s49
      %p58 = scmp.eq.s32.totalorder %s27, 1
      %p59 = por %p57, %p58
      %p60 = scmp.ne.s32.totalorder %s49, %s50
      %p61 = scmp.eq.s32.totalorder %s27, 0
      %p62 = por %p60, %p61
      %p63 = scmp.ne.s32.totalorder %s49, %s50
      %p64 = scmp.eq.s32.totalorder %s28, 1
      %p65 = por %p63, %p64
      %p67 = scmp.ne.s32.totalorder %s50, %s66
      %p68 = scmp.eq.s32.totalorder %s28, 0
      %p69 = por %p67, %p68
      %s71 = sadd.s32 %s70, 1
      %p74 = scmp.eq.s32.totalorder %s22, 1
      %p75 = scmp.ne.s32.totalorder %s70, %s72
      %p76 = scmp.eq.s32.totalorder %s22, 0
      %p77 = por %p75, %p76
      %p78 = scmp.ne.s32.totalorder %s70, %s72
      %p79 = scmp.eq.s32.totalorder %s27, 1
      %p80 = por %p78, %p79
      %p81 = scmp.ne.s32.totalorder %s72, %s73
      %p82 = scmp.eq.s32.totalorder %s27, 0
      %p83 = por %p81, %p82
      %p84 = scmp.ne.s32.totalorder %s72, %s73
      %p85 = scmp.eq.s32.totalorder %s28, 1
      %p86 = por %p84, %p85
      %p88 = scmp.ne.s32.totalorder %s73, %s87
      %p89 = scmp.eq.s32.totalorder %s28, 0
      %p90 = por %p88, %p89
      %s92 = sadd.s32 %s91, 1
      %p95 = scmp.eq.s32.totalorder %s22, 1
      %p96 = scmp.ne.s32.totalorder %s91, %s93
      %p97 = scmp.eq.s32.totalorder %s22, 0
      %p98 = por %p96, %p97
      %p99 = scmp.ne.s32.totalorder %s91, %s93
      %p100 = scmp.eq.s32.totalorder %s27, 1
      %p101 = por %p99, %p100
      %p102 = scmp.ne.s32.totalorder %s93, %s94
      %p103 = scmp.eq.s32.totalorder %s27, 0
      %p104 = por %p102, %p103
      %p105 = scmp.ne.s32.totalorder %s93, %s94
      %p106 = scmp.eq.s32.totalorder %s28, 1
      %p107 = por %p105, %p106
      %p109 = scmp.ne.s32.totalorder %s94, %s108
      %p110 = scmp.eq.s32.totalorder %s28, 0
      %p111 = por %p109, %p110
      %s113 = sadd.s32 %s112, 1
      %p116 = scmp.eq.s32.totalorder %s22, 1
      %p117 = scmp.ne.s32.totalorder %s112, %s114
      %p118 = scmp.eq.s32.totalorder %s22, 0
      %p119 = por %p117, %p118
      %p120 = scmp.ne.s32.totalorder %s112, %s114
      %p121 = scmp.eq.s32.totalorder %s27, 1
      %p122 = por %p120, %p121
      %p123 = scmp.ne.s32.totalorder %s114, %s115
      %p124 = scmp.eq.s32.totalorder %s27, 0
      %p125 = por %p123, %p124
      %p126 = scmp.ne.s32.totalorder %s114, %s115
      %p127 = scmp.eq.s32.totalorder %s28, 1
      %p128 = por %p126, %p127
      %p130 = scmp.ne.s32.totalorder %s115, %s129
      %p131 = scmp.eq.s32.totalorder %s28, 0
      %p132 = por %p130, %p131
      %s133 = ssub.s32 %s29, %s41
      %s134 = ssub.s32 %s30, %s37
      %s135 = sor.u32 %s133, %s134
      %p136 = scmp.eq.s32.totalorder %s135, 0
      %s138 = sadd.s32 %s137, 1
      %s139 = scalar_select %p136, %s137, %s138
      %p142 = pneg %p136
      %p143 = scmp.eq.s32.totalorder %s22, 1
      %p144 = por %p142, %p143
      %p145 = scmp.ne.s32.totalorder %s137, %s140
      %p146 = scmp.eq.s32.totalorder %s22, 0
      %p147 = por %p145, %p146
      %p148 = scmp.ne.s32.totalorder %s137, %s140
      %p149 = scmp.eq.s32.totalorder %s27, 1
      %p150 = por %p148, %p149
      %p151 = scmp.ne.s32.totalorder %s140, %s141
      %p152 = scmp.eq.s32.totalorder %s27, 0
      %p153 = por %p151, %p152
      %p154 = scmp.ne.s32.totalorder %s140, %s141
      %p155 = scmp.eq.s32.totalorder %s28, 1
      %p156 = por %p154, %p155
      %p158 = scmp.ne.s32.totalorder %s141, %s157
      %p159 = scmp.eq.s32.totalorder %s28, 0
      %p160 = por %p158, %p159
      %s161 = ssub.s32 %s29, %s41
      %s162 = ssub.s32 %s30, %s37
      %s163 = sor.u32 %s161, %s162
      %p164 = scmp.eq.s32.totalorder %s163, 0
      %s166 = sadd.s32 %s165, 1
      %s167 = scalar_select %p164, %s165, %s166
      %p170 = pneg %p164
      %p171 = scmp.eq.s32.totalorder %s22, 1
      %p172 = por %p170, %p171
      %p173 = scmp.ne.s32.totalorder %s165, %s168
      %p174 = scmp.eq.s32.totalorder %s22, 0
      %p175 = por %p173, %p174
      %p176 = scmp.ne.s32.totalorder %s165, %s168
      %p177 = scmp.eq.s32.totalorder %s27, 1
      %p178 = por %p176, %p177
      %p179 = scmp.ne.s32.totalorder %s168, %s169
      %p180 = scmp.eq.s32.totalorder %s27, 0
      %p181 = por %p179, %p180
      %p182 = scmp.ne.s32.totalorder %s168, %s169
      %p183 = scmp.eq.s32.totalorder %s28, 1
      %p184 = por %p182, %p183
      %p186 = scmp.ne.s32.totalorder %s169, %s185
      %p187 = scmp.eq.s32.totalorder %s28, 0
      %p188 = por %p186, %p187
      %p189 = scmp.le.s32.totalorder 1, %s22
      %p190 = scmp.lt.s32.totalorder %s22, 3
      %p191 = pnand %p189, %p190
      %p192 = pneg %p191
      // Predicated region
      $region9: #{tpu_custom_call.1} parent=5 // pred_check
        _
      $region10: #{tpu_custom_call.1} parent=5 // pred_check_branch
        %194 = sbr.rel (%p191) target = $region12
      $region11: #{tpu_custom_call.1} parent=5 // pred_region
        %s195 = ssub.s32 %s22, 1
        // Predicated region
        $region13: #{tpu_custom_call.1} parent=11 // pred_check
          %p196 = pneg %p83
        $region14: #{tpu_custom_call.1} parent=11 // pred_check_branch
          %198 = sbr.rel (%p196) target = $region16
        $region15: #{tpu_custom_call.1} parent=11 // pred_region
          %s200 = ssub.s32 128, 128
          %201 = vsyncadd [#allocation6], %s200
          %s202 = sshll.u32 [#allocation5], 4
          %s203 = int_to_ptr.vmem [resolvable:$true] %s202
          %208 = dma.hbm_to_vmem [thread:$0]  %s1, 128, %s203, [#allocation6], 64, 64, 4
        $region16: #{tpu_custom_call.1} parent=11 // pred_fallthru
          _
        // Predicated region
        $region17: #{tpu_custom_call.1} parent=11 // pred_check
          %p209 = pneg %p104
        $region18: #{tpu_custom_call.1} parent=11 // pred_check_branch
          %211 = sbr.rel (%p209) target = $region20
        $region19: #{tpu_custom_call.1} parent=11 // pred_region
          %s213 = ssub.s32 128, 128
          %214 = vsyncadd [#allocation6], %s213
          %s215 = sshll.u32 [#allocation7], 4
          %s216 = int_to_ptr.vmem [resolvable:$true] %s215
          %221 = dma.hbm_to_vmem [thread:$0]  %s2, 128, %s216, [#allocation6], 64, 64, 4
        $region20: #{tpu_custom_call.1} parent=11 // pred_fallthru
          _
        // Predicated region
        $region21: #{tpu_custom_call.1} parent=11 // pred_check
          %p222 = pneg %p125
        $region22: #{tpu_custom_call.1} parent=11 // pred_check_branch
          %224 = sbr.rel (%p222) target = $region24
        $region23: #{tpu_custom_call.1} parent=11 // pred_region
          _
        $region24: #{tpu_custom_call.1} parent=11 // pred_fallthru
          _
      $region12: #{tpu_custom_call.1} parent=5 // pred_fallthru
        _
      %p225 = scmp.lt.s32.totalorder %s22, 2
      // Predicated region
      $region25: #{tpu_custom_call.1} parent=5 // pred_check
        %p226 = pneg %p225
      $region26: #{tpu_custom_call.1} parent=5 // pred_check_branch
        %228 = sbr.rel (%p226) target = $region28
      $region27: #{tpu_custom_call.1} parent=5 // pred_region
        // Predicated region
        $region29: #{tpu_custom_call.1} parent=27 // pred_check
          %p229 = pneg %p56
        $region30: #{tpu_custom_call.1} parent=27 // pred_check_branch
          %231 = sbr.rel (%p229) target = $region32
        $region31: #{tpu_custom_call.1} parent=27 // pred_region
          %s232 = sand.u32 %s46, 1
          %s233 = scalar_lea.sflag [#allocation3], %s232
          %s234 = sand.u32 %s46, 1
          %s235 = smul.addr %s234, 4
          %s236 = scalar_lea.vmem [#allocation2], %s235
          %s238 = ssub.s32 64, 64
          %239 = vsyncadd %s233, %s238
          %s240 = sadd.s32 %s30, %s29
          %s241 = smul.addr %s240, 64
          %s242 = scalar_lea.hbm %s0, %s241
          %s244 = sshll.u32 %s236, 4
          %s245 = int_to_ptr.vmem [resolvable:$true] %s244
          %247 = dma.hbm_to_vmem [thread:$0]  %s242, 64, %s245, %s233
        $region32: #{tpu_custom_call.1} parent=27 // pred_fallthru
          _
      $region28: #{tpu_custom_call.1} parent=5 // pred_fallthru
        _
      %p248 = scmp.le.s32.totalorder 1, %s22
      %p249 = scmp.lt.s32.totalorder %s22, 3
      %p250 = pnand %p248, %p249
      %p251 = pneg %p250
      // Predicated region
      $region33: #{tpu_custom_call.1} parent=5 // pred_check
        _
      $region34: #{tpu_custom_call.1} parent=5 // pred_check_branch
        %253 = sbr.rel (%p250) target = $region36
      $region35: #{tpu_custom_call.1} parent=5 // pred_region
        %s254 = ssub.s32 %s22, 1
        %s255 = sand.u32 %s49, 1
        %s256 = scalar_lea.sflag [#allocation3], %s255
        %s257 = sand.u32 %s49, 1
        %s258 = smul.addr %s257, 4
        %s259 = scalar_lea.vmem [#allocation2], %s258
        // Predicated region
        $region37: #{tpu_custom_call.1} parent=35 // pred_check
          %p260 = pneg %p62
        $region38: #{tpu_custom_call.1} parent=35 // pred_check_branch
          %262 = sbr.rel (%p260) target = $region40
        $region39: #{tpu_custom_call.1} parent=35 // pred_region
          %263 = dma.done %s256, 64
        $region40: #{tpu_custom_call.1} parent=35 // pred_fallthru
          _
        // Predicated region
        $region41: #{tpu_custom_call.1} parent=35 // pred_check
          %p264 = pneg %p83
        $region42: #{tpu_custom_call.1} parent=35 // pred_check_branch
          %266 = sbr.rel (%p264) target = $region44
        $region43: #{tpu_custom_call.1} parent=35 // pred_region
          %267 = dma.done [#allocation6], 128
        $region44: #{tpu_custom_call.1} parent=35 // pred_fallthru
          _
        // Predicated region
        $region45: #{tpu_custom_call.1} parent=35 // pred_check
          %p268 = pneg %p104
        $region46: #{tpu_custom_call.1} parent=35 // pred_check_branch
          %270 = sbr.rel (%p268) target = $region48
        $region47: #{tpu_custom_call.1} parent=35 // pred_region
          %271 = dma.done [#allocation6], 128
        $region48: #{tpu_custom_call.1} parent=35 // pred_fallthru
          _
        %s272 = sand.u32 %s49, 1
        %s273 = scalar_lea.sflag [#allocation3], %s272
        %s274 = sand.u32 %s49, 1
        %s275 = smul.addr %s274, 4
        %s276 = scalar_lea.vmem [#allocation2], %s275
        %p277 = pneg %p62
        %p278 = pneg %p59
        %p279 = pneg %p83
        %p280 = pneg %p80
        %p281 = pneg %p104
        %p282 = pneg %p101
        %p283 = pneg %p125
        %p284 = pneg %p122
        %p285 = pneg %p153
        %p286 = pneg %p150
        %s287 = sand.u32 %s140, 1
        %s288 = scalar_lea.sflag [#allocation4], %s287
        %s289 = sand.u32 %s140, 1
        %s290 = smul.addr %s289, 8
        %s291 = scalar_lea.vmem [#allocation8], %s290
        %p292 = pneg %p181
        %p293 = pneg %p178
        %s294 = sand.u32 %s168, 1
        %s295 = scalar_lea.sflag [#allocation10], %s294
        %s296 = sand.u32 %s168, 1
        %s297 = smul.addr %s296, 8
        %s298 = scalar_lea.vmem [#allocation9], %s297
        %v300 = vld [vmem:[%s259] sm:$0xf]
        %v301 = vld [vmem:[#allocation5] sm:$0xf]
        %v302 = vld [vmem:[#allocation5 + $0x4] sm:$0xf]
        %v303 = vld [vmem:[%s3] sm:$0x1]
        %v305 = vlaneseq
        %v306 = vshrl.u32 %v305, 7
        %v307 = vsub.s32 0, %v306
        %v308 = vrot.slane %v303, %v307
        %v312 = vunpack.c.l.b16 %v301
        %v313 = vunpack.c.l.b16 %v302
        %v314 = vpack.c.b16 %v313, %v312
        %vm316 = vcmask 130048
        %v318 = vsel %vm316, %v300, 0
        %320 = vmatprep.subr.bf16.mxu0 0
        %321 = vmatpush1.bf16.msra.mxu0 0
        %322 = vmatprep.subr.bf16.mxu0 0
        %323 = vmatpush1.bf16.msra.mxu0 0
        %324 = vmatprep.subr.bf16.mxu0 0
        %325 = vmatpush1.bf16.msra.mxu0 0
        %326 = vmatprep.subr.bf16.mxu0 0
        %327 = vmatpush1.bf16.msra.mxu0 0
        %328 = vmatprep.subr.bf16.mxu0 0
        %329 = vmatpush1.bf16.msra.mxu0 0
        %330 = vmatprep.subr.bf16.mxu0 0
        %331 = vmatpush1.bf16.msra.mxu0 0
        %332 = vmatprep.subr.bf16.mxu0 0
        %333 = vmatpush1.bf16.msra.mxu0 0
        %334 = vmatprep.subr.bf16.mxu0 0
        %335 = vmatpush1.bf16.msra.mxu0 %v314
        %336 = vmatprep.subr.bf16.mxu0 0
        %337 = vmatpush2.bf16.msra.mxu0 0
        %338 = vmatprep.subr.bf16.mxu0 0
        %339 = vmatpush2.bf16.msra.mxu0 0
        %340 = vmatprep.subr.bf16.mxu0 0
        %341 = vmatpush2.bf16.msra.mxu0 0
        %342 = vmatprep.subr.bf16.mxu0 0
        %343 = vmatpush2.bf16.msra.mxu0 0
        %344 = vmatprep.subr.bf16.mxu0 0
        %345 = vmatpush2.bf16.msra.mxu0 0
        %346 = vmatprep.subr.bf16.mxu0 0
        %347 = vmatpush2.bf16.msra.mxu0 0
        %348 = vmatprep.subr.bf16.mxu0 0
        %349 = vmatpush2.bf16.msra.mxu0 0
        %350 = vmatprep.subr.bf16.mxu0 0
        %351 = vmatpush2.bf16.msra.mxu0 0
        %352 = vmatprep.mubr.bf16.mxu0 0
        %353 = vmatmul.mubr.bf16.gmra.mxu0 %v318
        %v354 = vpop.f32.mrf.mxu0
        %v355 = vadd.f32 %v308, %v354
        %v356 = vpop.f32.mrf.mxu0
        %v357 = vpop.f32.mrf.mxu0
        %v358 = vpop.f32.mrf.mxu0
        %359 = vdwg.mxu0
        %360 = vst [vmem:[%s291] sm:$0xff] %v355
        %v361 = vld [vmem:[#allocation7] sm:$0xf]
        %v362 = vld [vmem:[#allocation7 + $0x4] sm:$0xf]
        %v365 = vunpack.c.l.b16 %v361
        %v366 = vunpack.c.l.b16 %v362
        %v367 = vpack.c.b16 %v366, %v365
        %369 = vmatprep.subr.bf16.mxu0 0
        %370 = vmatpush1.bf16.msra.mxu0 0
        %371 = vmatprep.subr.bf16.mxu0 0
        %372 = vmatpush1.bf16.msra.mxu0 0
        %373 = vmatprep.subr.bf16.mxu0 0
        %374 = vmatpush1.bf16.msra.mxu0 0
        %375 = vmatprep.subr.bf16.mxu0 0
        %376 = vmatpush1.bf16.msra.mxu0 0
        %377 = vmatprep.subr.bf16.mxu0 0
        %378 = vmatpush1.bf16.msra.mxu0 0
        %379 = vmatprep.subr.bf16.mxu0 0
        %380 = vmatpush1.bf16.msra.mxu0 0
        %381 = vmatprep.subr.bf16.mxu0 0
        %382 = vmatpush1.bf16.msra.mxu0 0
        %383 = vmatprep.subr.bf16.mxu0 0
        %384 = vmatpush1.bf16.msra.mxu0 %v367
        %385 = vmatprep.subr.bf16.mxu0 0
        %386 = vmatpush2.bf16.msra.mxu0 0
        %387 = vmatprep.subr.bf16.mxu0 0
        %388 = vmatpush2.bf16.msra.mxu0 0
        %389 = vmatprep.subr.bf16.mxu0 0
        %390 = vmatpush2.bf16.msra.mxu0 0
        %391 = vmatprep.subr.bf16.mxu0 0
        %392 = vmatpush2.bf16.msra.mxu0 0
        %393 = vmatprep.subr.bf16.mxu0 0
        %394 = vmatpush2.bf16.msra.mxu0 0
        %395 = vmatprep.subr.bf16.mxu0 0
        %396 = vmatpush2.bf16.msra.mxu0 0
        %397 = vmatprep.subr.bf16.mxu0 0
        %398 = vmatpush2.bf16.msra.mxu0 0
        %399 = vmatprep.subr.bf16.mxu0 0
        %400 = vmatpush2.bf16.msra.mxu0 0
        %401 = vmatprep.mubr.bf16.mxu0 0
        %402 = vmatmul.mubr.bf16.gmra.mxu0 %v318
        %v403 = vpop.f32.mrf.mxu0
        %v404 = vadd.f32 0.0, %v403
        %v405 = vpop.f32.mrf.mxu0
        %v406 = vpop.f32.mrf.mxu0
        %v407 = vpop.f32.mrf.mxu0
        %408 = vdwg.mxu0
        %409 = vst [vmem:[%s298] sm:$0xff] %v404
        %s410 = sand.u32 %s140, 1
        %s411 = scalar_lea.sflag [#allocation4], %s410
        %s412 = sand.u32 %s140, 1
        %s413 = smul.addr %s412, 8
        %s414 = scalar_lea.vmem [#allocation8], %s413
        %s415 = sand.u32 %s168, 1
        %s416 = scalar_lea.sflag [#allocation10], %s415
        %s417 = sand.u32 %s168, 1
        %s418 = smul.addr %s417, 8
        %s419 = scalar_lea.vmem [#allocation9], %s418
        // Predicated region
        $region49: #{tpu_custom_call.1} parent=35 // pred_check
          %p420 = pneg %p150
        $region50: #{tpu_custom_call.1} parent=35 // pred_check_branch
          %422 = sbr.rel (%p420) target = $region52
        $region51: #{tpu_custom_call.1} parent=35 // pred_region
          %s424 = ssub.s32 128, 128
          %425 = vsyncadd %s411, %s424
          %s426 = sadd.s32 %s32, %s31
          %s427 = smul.addr %s426, 128
          %s428 = scalar_lea.hbm %s4, %s427
          %s430 = sshll.u32 %s414, 4
          %s431 = int_to_ptr.vmem [resolvable:$true] %s430
          %433 = dma.vmem_to_hbm [thread:$0]  %s431, 128, %s428, %s411
        $region52: #{tpu_custom_call.1} parent=35 // pred_fallthru
          _
        // Predicated region
        $region53: #{tpu_custom_call.1} parent=35 // pred_check
          %p434 = pneg %p178
        $region54: #{tpu_custom_call.1} parent=35 // pred_check_branch
          %436 = sbr.rel (%p434) target = $region56
        $region55: #{tpu_custom_call.1} parent=35 // pred_region
          %s438 = ssub.s32 128, 128
          %439 = vsyncadd %s416, %s438
          %s440 = sadd.s32 %s32, %s31
          %s441 = smul.addr %s440, 128
          %s442 = scalar_lea.hbm %s5, %s441
          %s444 = sshll.u32 %s419, 4
          %s445 = int_to_ptr.vmem [resolvable:$true] %s444
          %447 = dma.vmem_to_hbm [thread:$0]  %s445, 128, %s442, %s416
        $region56: #{tpu_custom_call.1} parent=35 // pred_fallthru
          _
      $region36: #{tpu_custom_call.1} parent=5 // pred_fallthru
        _
      %p448 = scmp.le.s32.totalorder 2, %s22
      // Predicated region
      $region57: #{tpu_custom_call.1} parent=5 // pred_check
        %p449 = pneg %p448
      $region58: #{tpu_custom_call.1} parent=5 // pred_check_branch
        %451 = sbr.rel (%p449) target = $region60
      $region59: #{tpu_custom_call.1} parent=5 // pred_region
        %s452 = ssub.s32 %s22, 2
        // Predicated region
        $region61: #{tpu_custom_call.1} parent=59 // pred_check
          %p453 = pneg %p156
        $region62: #{tpu_custom_call.1} parent=59 // pred_check_branch
          %455 = sbr.rel (%p453) target = $region64
        $region63: #{tpu_custom_call.1} parent=59 // pred_region
          %s456 = sand.u32 %s141, 1
          %s457 = scalar_lea.sflag [#allocation4], %s456
          %s458 = sand.u32 %s141, 1
          %s459 = smul.addr %s458, 8
          %s460 = scalar_lea.vmem [#allocation8], %s459
          %461 = dma.done %s457, 128
        $region64: #{tpu_custom_call.1} parent=59 // pred_fallthru
          _
        // Predicated region
        $region65: #{tpu_custom_call.1} parent=59 // pred_check
          %p462 = pneg %p184
        $region66: #{tpu_custom_call.1} parent=59 // pred_check_branch
          %464 = sbr.rel (%p462) target = $region68
        $region67: #{tpu_custom_call.1} parent=59 // pred_region
          %s465 = sand.u32 %s169, 1
          %s466 = scalar_lea.sflag [#allocation10], %s465
          %s467 = sand.u32 %s169, 1
          %s468 = smul.addr %s467, 8
          %s469 = scalar_lea.vmem [#allocation9], %s468
          %470 = dma.done %s466, 128
        $region68: #{tpu_custom_call.1} parent=59 // pred_fallthru
          _
      $region60: #{tpu_custom_call.1} parent=5 // pred_fallthru
        _
    $region6: #{tpu_custom_call.1} parent=1 // loop_footer
      %s26 = sadd.s32 1, %s22
    $region7: #{tpu_custom_call.1} parent=1 // loop_footer_branch
      %21 = sbr.rel target = $region3
    $region8: #{tpu_custom_call.1} parent=1 // loop_exit
      _
    %471 = vsyncpa [#allocation3], 1
    %s472 = scalar_lea.sflag [#allocation3], 1
    %473 = vsyncpa %s472, 1
    %474 = vsyncpa [#allocation6], 1
    %475 = vsyncpa [#allocation4], 1
    %s476 = scalar_lea.sflag [#allocation4], 1
    %477 = vsyncpa %s476, 1
    %478 = vsyncpa [#allocation10], 1
    %s479 = scalar_lea.sflag [#allocation10], 1
    %480 = vsyncpa %s479, 1

</llo_original>
